<compile_context>
chip_gen: v5e
topology: v5e:2x2
jax: 0.10.0
libtpu: 0.0.40
codegen_flags: <defaults>
</compile_context>

<pallas_src>
import functools

import jax
import jax.numpy as jnp
from jax.experimental import pallas as pl
from jax.experimental.pallas import tpu as pltpu

HIDDEN = 256


def _round_up(n, m):
    return (n + m - 1) // m * m


def _cdiv(a, b):
    return (a + b - 1) // b


def _dqn_mlp_kernel(x_ref, w1_ref, b1_ref, w2_ref, b2_ref, w3_ref, b3_ref, o_ref):
    # One batch tile per grid step; all three layers fused.
    # bf16 MXU operands, f32 accumulation / bias add / ReLU (v5e-safe epilogue).
    x = x_ref[...].astype(jnp.bfloat16)

    h1 = jnp.dot(x, w1_ref[...], preferred_element_type=jnp.float32) + b1_ref[...]
    h1 = jnp.maximum(h1, 0.0)

    h2 = jnp.dot(h1.astype(jnp.bfloat16), w2_ref[...],
                 preferred_element_type=jnp.float32) + b2_ref[...]
    h2 = jnp.maximum(h2, 0.0)

    out = jnp.dot(h2.astype(jnp.bfloat16), w3_ref[...],
                  preferred_element_type=jnp.float32) + b3_ref[...]
    o_ref[...] = out.astype(o_ref.dtype)


def _choose_batch_tiling(batch):
    """Return (block_b, padded_batch).

    Small B: one tile, padded only to the sublane multiple of 8 (no wasted MXU rows).
    Large B: an even number of <=512-row tiles so v7x can split the batch axis
    evenly across its two TensorCores; also amortizes per-grid-step overhead.
    """
    b8 = _round_up(batch, 8)
    if b8 <= 256:
        return b8, b8
    nb = 2 * _cdiv(b8, 1024)                 # even tile count, tiles <= 512 rows
    block_b = _round_up(_cdiv(b8, nb), 8)
    return block_b, nb * block_b


@functools.partial(jax.jit, static_argnames=("action_dim",))
def dqn_forward(x, params, action_dim):
    """x: [B, state_dim] float32.  params: output of prepare_params (bf16 weights,
    fc3 already padded to a 128-multiple of columns)."""
    w1, b1 = params["w1"], params["b1"]
    w2, b2 = params["w2"], params["b2"]
    w3, b3 = params["w3"], params["b3"]

    B, S = x.shape
    H = w1.shape[1]
    A_pad = w3.shape[1]                      # lane-dense, pre-padded at prepare time

    block_b, B_pad = _choose_batch_tiling(B)
    nb = B_pad // block_b

    x_p = x if B_pad == B else jnp.pad(x, ((0, B_pad - B), (0, 0)))

    flops = 2 * B_pad * (S * H + H * H + H * A_pad)
    bytes_accessed = (
        4 * x_p.size
        + 2 * (w1.size + w2.size + w3.size)   # bf16 weights
        + 4 * (b1.size + b2.size + b3.size)   # f32 biases
        + 4 * B_pad * A_pad                   # f32 output
    )
    cost = pl.CostEstimate(flops=flops, transcendentals=0,
                           bytes_accessed=bytes_accessed)

    out_padded = pl.pallas_call(
        _dqn_mlp_kernel,
        out_shape=jax.ShapeDtypeStruct((B_pad, A_pad), jnp.float32),
        grid=(nb,),
        in_specs=[
            # Activations: tiled along the batch grid axis (software-pipelined DMA).
            pl.BlockSpec((block_b, S), lambda i: (i, 0)),
            # Weights / biases: constant block index -> fetched once, VMEM-resident.
            # (pipeline_mode=pl.Buffered(1) would drop their double-buffer; only
            #  worth it if block_b is scaled past 1024 on v7x's smaller VMEM.)
            pl.BlockSpec((S, H), lambda i: (0, 0)),
            pl.BlockSpec((1, H), lambda i: (0, 0)),
            pl.BlockSpec((H, H), lambda i: (0, 0)),
            pl.BlockSpec((1, H), lambda i: (0, 0)),
            pl.BlockSpec((H, A_pad), lambda i: (0, 0)),
            pl.BlockSpec((1, A_pad), lambda i: (0, 0)),
        ],
        out_specs=pl.BlockSpec((block_b, A_pad), lambda i: (i, 0)),
        compiler_params=pltpu.CompilerParams(
            dimension_semantics=("parallel",),   # v7x: shard batch tiles across 2 TCs
        ),
        cost_estimate=cost,
    )(x_p, w1, b1, w2, b2, w3, b3)

    return out_padded[:B, :action_dim]


def init_params(key, state_dim, action_dim, hidden=HIDDEN):
    """PyTorch-like uniform fan-in init; [in, out] weight layout (kernel does x @ W + b)."""
    ks = jax.random.split(key, 6)

    def uniform(k, shape, fan_in):
        bound = 1.0 / jnp.sqrt(jnp.float32(fan_in))
        return jax.random.uniform(k, shape, jnp.float32, -bound, bound)

    return {
        "w1": uniform(ks[0], (state_dim, hidden), state_dim),
        "b1": uniform(ks[1], (1, hidden), state_dim),
        "w2": uniform(ks[2], (hidden, hidden), hidden),
        "b2": uniform(ks[3], (1, hidden), hidden),
        "w3": uniform(ks[4], (hidden, action_dim), hidden),
        "b3": uniform(ks[5], (1, action_dim), hidden),
    }


def prepare_params(params):
    """One-time prep (off the hot path): pad fc3 to a lane-dense 128-multiple width
    and cast the MXU weight operands to bf16 (biases stay f32)."""
    A = params["w3"].shape[1]
    pad_a = _round_up(A, 128) - A
    return {
        "w1": params["w1"].astype(jnp.bfloat16),
        "b1": params["b1"].astype(jnp.float32),
        "w2": params["w2"].astype(jnp.bfloat16),
        "b2": params["b2"].astype(jnp.float32),
        "w3": jnp.pad(params["w3"], ((0, 0), (0, pad_a))).astype(jnp.bfloat16),
        "b3": jnp.pad(params["b3"], ((0, 0), (0, pad_a))).astype(jnp.float32),
    }


def reference_forward(x, prepared):
    """Pure-JAX reference using the same bf16-operand / f32-accumulate math."""
    bf16, f32 = jnp.bfloat16, jnp.float32
    h1 = jnp.maximum(
        jnp.dot(x.astype(bf16), prepared["w1"], preferred_element_type=f32)
        + prepared["b1"], 0.0)
    h2 = jnp.maximum(
        jnp.dot(h1.astype(bf16), prepared["w2"], preferred_element_type=f32)
        + prepared["b2"], 0.0)
    return (jnp.dot(h2.astype(bf16), prepared["w3"], preferred_element_type=f32)
            + prepared["b3"])


if __name__ == "__main__":
    key = jax.random.PRNGKey(0)
    k_param, k_x = jax.random.split(key)

    batch, state_dim, action_dim = 8, 32, 8
    raw_params = init_params(k_param, state_dim, action_dim)
    params = prepare_params(raw_params)          # padded + bf16, done once
    x = jax.random.normal(k_x, (batch, state_dim), jnp.float32)

    out = dqn_forward(x, params, action_dim)
    jax.block_until_ready(out)
    assert out.shape == (batch, action_dim)

    ref = reference_forward(x, params)[:, :action_dim]
    assert jnp.allclose(out, ref, atol=1e-2, rtol=1e-2)

    # Multi-tile batch (grid > 1) to exercise the pipelined / parallel path.
    big_b = 288
    xb = jax.random.normal(jax.random.PRNGKey(1), (big_b, state_dim), jnp.float32)
    out_b = dqn_forward(xb, params, action_dim)
    jax.block_until_ready(out_b)
    assert out_b.shape == (big_b, action_dim)
    ref_b = reference_forward(xb, params)[:, :action_dim]
    assert jnp.allclose(out_b, ref_b, atol=1e-2, rtol=1e-2)

    print("KERNEL_OK")
</pallas_src>

<mosaic_0001>
module attributes {stable_mosaic.version = 11 : i64} {
  func.func @_dqn_mlp_kernel(%arg0: i32, %arg1: memref<8x32xf32, #tpu.memory_space<vmem>>, %arg2: memref<32x256xbf16, #tpu.memory_space<vmem>>, %arg3: memref<1x256xf32, #tpu.memory_space<vmem>>, %arg4: memref<256x256xbf16, #tpu.memory_space<vmem>>, %arg5: memref<1x256xf32, #tpu.memory_space<vmem>>, %arg6: memref<256x128xbf16, #tpu.memory_space<vmem>>, %arg7: memref<1x128xf32, #tpu.memory_space<vmem>>, %arg8: memref<8x128xf32, #tpu.memory_space<vmem>>) attributes {dimension_semantics = [#tpu.dimension_semantics<parallel>], iteration_bounds = array<i64: 1>, scalar_prefetch = 0 : i64, scratch_operands = 0 : i64, tpu.core_type = #tpu.core_type<tc>, window_params = [{transform_indices = @transform_0, window_bounds = array<i64: 8, 32>}, {pipeline_mode = #tpu.pipeline_mode<synchronous>, transform_indices = @transform_1, window_bounds = array<i64: 32, 256>}, {pipeline_mode = #tpu.pipeline_mode<synchronous>, transform_indices = @transform_2, window_bounds = array<i64: 1, 256>}, {pipeline_mode = #tpu.pipeline_mode<synchronous>, transform_indices = @transform_3, window_bounds = array<i64: 256, 256>}, {pipeline_mode = #tpu.pipeline_mode<synchronous>, transform_indices = @transform_4, window_bounds = array<i64: 1, 256>}, {pipeline_mode = #tpu.pipeline_mode<synchronous>, transform_indices = @transform_5, window_bounds = array<i64: 256, 128>}, {pipeline_mode = #tpu.pipeline_mode<synchronous>, transform_indices = @transform_6, window_bounds = array<i64: 1, 128>}, {transform_indices = @transform_7, window_bounds = array<i64: 8, 128>}]} {
    %c0 = arith.constant 0 : index
    %c0_0 = arith.constant 0 : index
    %0 = vector.load %arg1[%c0, %c0_0] : memref<8x32xf32, #tpu.memory_space<vmem>>, vector<8x32xf32>
    %1 = arith.truncf %0 : vector<8x32xf32> to vector<8x32xbf16>
    %c0_1 = arith.constant 0 : index
    %c0_2 = arith.constant 0 : index
    %2 = vector.load %arg2[%c0_1, %c0_2] : memref<32x256xbf16, #tpu.memory_space<vmem>>, vector<32x256xbf16>
    %cst = arith.constant dense<0.000000e+00> : vector<8x256xf32>
    %3 = tpu.matmul %1, %2, %cst {dimension_numbers = #tpu.dot_dimension_numbers<[1], [0], [0], [1], [0, 0, 1, 1], [], []>} : vector<8x32xbf16>, vector<32x256xbf16>, vector<8x256xf32> -> vector<8x256xf32>
    %c0_3 = arith.constant 0 : index
    %c0_4 = arith.constant 0 : index
    %4 = vector.load %arg3[%c0_3, %c0_4] : memref<1x256xf32, #tpu.memory_space<vmem>>, vector<1x256xf32>
    %5 = vector.broadcast %4 : vector<1x256xf32> to vector<8x256xf32>
    %6 = arith.addf %3, %5 : vector<8x256xf32>
    %cst_5 = arith.constant 0.000000e+00 : f32
    %7 = vector.broadcast %cst_5 : f32 to vector<8x256xf32>
    %8 = arith.maximumf %6, %7 : vector<8x256xf32>
    %9 = arith.truncf %8 : vector<8x256xf32> to vector<8x256xbf16>
    %c0_6 = arith.constant 0 : index
    %c0_7 = arith.constant 0 : index
    %10 = vector.load %arg4[%c0_6, %c0_7] : memref<256x256xbf16, #tpu.memory_space<vmem>>, vector<256x256xbf16>
    %cst_8 = arith.constant dense<0.000000e+00> : vector<8x256xf32>
    %11 = tpu.matmul %9, %10, %cst_8 {dimension_numbers = #tpu.dot_dimension_numbers<[1], [0], [0], [1], [0, 0, 1, 1], [], []>} : vector<8x256xbf16>, vector<256x256xbf16>, vector<8x256xf32> -> vector<8x256xf32>
    %c0_9 = arith.constant 0 : index
    %c0_10 = arith.constant 0 : index
    %12 = vector.load %arg5[%c0_9, %c0_10] : memref<1x256xf32, #tpu.memory_space<vmem>>, vector<1x256xf32>
    %13 = vector.broadcast %12 : vector<1x256xf32> to vector<8x256xf32>
    %14 = arith.addf %11, %13 : vector<8x256xf32>
    %cst_11 = arith.constant 0.000000e+00 : f32
    %15 = vector.broadcast %cst_11 : f32 to vector<8x256xf32>
    %16 = arith.maximumf %14, %15 : vector<8x256xf32>
    %17 = arith.truncf %16 : vector<8x256xf32> to vector<8x256xbf16>
    %c0_12 = arith.constant 0 : index
    %c0_13 = arith.constant 0 : index
    %18 = vector.load %arg6[%c0_12, %c0_13] : memref<256x128xbf16, #tpu.memory_space<vmem>>, vector<256x128xbf16>
    %cst_14 = arith.constant dense<0.000000e+00> : vector<8x128xf32>
    %19 = tpu.matmul %17, %18, %cst_14 {dimension_numbers = #tpu.dot_dimension_numbers<[1], [0], [0], [1], [0, 0, 1, 1], [], []>} : vector<8x256xbf16>, vector<256x128xbf16>, vector<8x128xf32> -> vector<8x128xf32>
    %c0_15 = arith.constant 0 : index
    %c0_16 = arith.constant 0 : index
    %20 = vector.load %arg7[%c0_15, %c0_16] : memref<1x128xf32, #tpu.memory_space<vmem>>, vector<1x128xf32>
    %21 = vector.broadcast %20 : vector<1x128xf32> to vector<8x128xf32>
    %22 = arith.addf %19, %21 : vector<8x128xf32>
    %c0_17 = arith.constant 0 : index
    %c0_18 = arith.constant 0 : index
    %23 = vector.load %arg8[%c0_17, %c0_18] : memref<8x128xf32, #tpu.memory_space<vmem>>, vector<8x128xf32>
    tpu.vector_store %arg8[%c0_17, %c0_18], %22 {strides = array<i32>} : memref<8x128xf32, #tpu.memory_space<vmem>>, vector<8x128xf32>,
    return
  }
  func.func @transform_0(%arg0: i32) -> (i32, i32) {
    %c0_i32 = arith.constant 0 : i32
    %c0_i32_0 = arith.constant 0 : i32
    return %arg0, %c0_i32 : i32, i32
  }
  func.func @transform_1(%arg0: i32) -> (i32, i32) {
    %c0_i32 = arith.constant 0 : i32
    %c0_i32_0 = arith.constant 0 : i32
    %c0_i32_1 = arith.constant 0 : i32
    return %c0_i32, %c0_i32_0 : i32, i32
  }
  func.func @transform_2(%arg0: i32) -> (i32, i32) {
    %c0_i32 = arith.constant 0 : i32
    %c0_i32_0 = arith.constant 0 : i32
    %c0_i32_1 = arith.constant 0 : i32
    return %c0_i32, %c0_i32_0 : i32, i32
  }
  func.func @transform_3(%arg0: i32) -> (i32, i32) {
    %c0_i32 = arith.constant 0 : i32
    %c0_i32_0 = arith.constant 0 : i32
    %c0_i32_1 = arith.constant 0 : i32
    return %c0_i32, %c0_i32_0 : i32, i32
  }
  func.func @transform_4(%arg0: i32) -> (i32, i32) {
    %c0_i32 = arith.constant 0 : i32
    %c0_i32_0 = arith.constant 0 : i32
    %c0_i32_1 = arith.constant 0 : i32
    return %c0_i32, %c0_i32_0 : i32, i32
  }
  func.func @transform_5(%arg0: i32) -> (i32, i32) {
    %c0_i32 = arith.constant 0 : i32
    %c0_i32_0 = arith.constant 0 : i32
    %c0_i32_1 = arith.constant 0 : i32
    return %c0_i32, %c0_i32_0 : i32, i32
  }
  func.func @transform_6(%arg0: i32) -> (i32, i32) {
    %c0_i32 = arith.constant 0 : i32
    %c0_i32_0 = arith.constant 0 : i32
    %c0_i32_1 = arith.constant 0 : i32
    return %c0_i32, %c0_i32_0 : i32, i32
  }
  func.func @transform_7(%arg0: i32) -> (i32, i32) {
    %c0_i32 = arith.constant 0 : i32
    %c0_i32_0 = arith.constant 0 : i32
    return %arg0, %c0_i32 : i32, i32
  }
}

</mosaic_0001>

<llo_original>
// kernel: dqn_forward.1
$region0: #{dqn_forward.1}
  #allocation0 [shape = 'u32[]', space=smem, size = 0x4, offset = 0x4, fixed_abs, tag = 'smem constant byte address 0x4 - core index']
  #allocation1 [shape = 'u32[72,128]{1,0:T(1,128)}', space=vmem, size = 0x9000, scoped, tag = 'internal scratch']
  %s0 = inlined_call_operand.hbm [shape: f32[8,32], index: 0, kind: input, shape index: {}]
  %s1 = inlined_call_operand.hbm [shape: bf16[32,256], index: 1, kind: input, shape index: {}]
  %s2 = inlined_call_operand.hbm [shape: f32[1,256], index: 2, kind: input, shape index: {}]
  %s3 = inlined_call_operand.hbm [shape: bf16[256,256], index: 3, kind: input, shape index: {}]
  %s4 = inlined_call_operand.hbm [shape: f32[1,256], index: 4, kind: input, shape index: {}]
  %s5 = inlined_call_operand.hbm [shape: bf16[256,128], index: 5, kind: input, shape index: {}]
  %s6 = inlined_call_operand.vmem [shape: f32[1,128], index: 6, kind: input, shape index: {}]
  %s7 = inlined_call_operand.hbm [shape: f32[8,128], index: 7, kind: output, shape index: {}]
  %s8 = sld [smem:[#allocation0]]
  $region62: #{dqn_forward.1} parent=0
    _
  %s10 = ssub.s32 1, %s8
  %s11 = scalar_select 0, %s10, %s8
  $region1: #{dqn_forward.1} parent=0
    #allocation2 [shape = 'u8[4096]{0}', space=vmem, size = 0x1000, scoped, tag = 'input window, operand 0, single buffered']
    #allocation3 [shape = 's32[1]{0}', space=sflag, size = 0x4, scoped, tag = 'scoped memory for dqn_forward.1']
    #allocation4 [shape = 's32[1]{0}', space=sflag, size = 0x4, scoped, tag = 'scoped memory for dqn_forward.1']
    #allocation5 [shape = 'u8[16384]{0}', space=vmem, size = 0x4000, scoped, tag = 'input window, operand 1, single buffered']
    #allocation6 [shape = 's32[1]{0}', space=sflag, size = 0x4, scoped, tag = 'scoped memory for dqn_forward.1']
    #allocation7 [shape = 'u8[1024]{0}', space=vmem, size = 0x400, scoped, tag = 'input window, operand 2, single buffered']
    #allocation8 [shape = 'u8[131072]{0}', space=vmem, size = 0x20000, scoped, tag = 'input window, operand 3, single buffered']
    #allocation9 [shape = 's32[1]{0}', space=sflag, size = 0x4, scoped, tag = 'scoped memory for dqn_forward.1']
    #allocation10 [shape = 'u8[1024]{0}', space=vmem, size = 0x400, scoped, tag = 'input window, operand 4, single buffered']
    #allocation11 [shape = 'u8[65536]{0}', space=vmem, size = 0x10000, scoped, tag = 'input window, operand 5, single buffered']
    #allocation12 [shape = 's32[1]{0}', space=sflag, size = 0x4, scoped, tag = 'scoped memory for dqn_forward.1']
    #allocation13 [shape = 'u8[4096]{0}', space=vmem, size = 0x1000, scoped, tag = 'output window, operand 0, single buffered']
    %12 = vsyncpa [#allocation3], 0
    %13 = vsyncpa [#allocation6], 0
    %14 = vsyncpa [#allocation9], 0
    %15 = vsyncpa [#allocation12], 0
    %16 = vsyncpa [#allocation4], 0
    // Predicated region
    $region2: #{dqn_forward.1} parent=1 // pred_check
      _
    $region3: #{dqn_forward.1} parent=1 // pred_check_branch
      %18 = sbr.rel (0) target = $region5
    $region4: #{dqn_forward.1} parent=1 // pred_region
      %20 = vsyncadd [#allocation3], 0
      %s22 = sshll.u32 %s0, 4
      %s23 = int_to_ptr.hbm [resolvable:$true] %s22
      %s24 = sshll.u32 [#allocation2], 4
      %s25 = int_to_ptr.vmem [resolvable:$true] %s24
      %27 = dma.hbm_to_vmem [thread:$0]  %s23, 128, %s25, [#allocation3]
    $region5: #{dqn_forward.1} parent=1 // pred_fallthru
      _
    // Predicated region
    $region6: #{dqn_forward.1} parent=1 // pred_check
      _
    $region7: #{dqn_forward.1} parent=1 // pred_check_branch
      %29 = sbr.rel (0) target = $region9
    $region8: #{dqn_forward.1} parent=1 // pred_region
      %31 = vsyncadd [#allocation6], 0
      %s32 = sshll.u32 %s1, 4
      %s33 = int_to_ptr.hbm [resolvable:$true] %s32
      %s34 = sshll.u32 [#allocation5], 4
      %s35 = int_to_ptr.vmem [resolvable:$true] %s34
      %40 = dma.hbm_to_vmem [thread:$0]  %s33, 512, %s35, [#allocation6], 128, 128, 8
    $region9: #{dqn_forward.1} parent=1 // pred_fallthru
      _
    // Predicated region
    $region10: #{dqn_forward.1} parent=1 // pred_check
      _
    $region11: #{dqn_forward.1} parent=1 // pred_check_branch
      %42 = sbr.rel (0) target = $region13
    $region12: #{dqn_forward.1} parent=1 // pred_region
      %44 = vsyncadd [#allocation6], 0
      %s46 = sshll.u32 %s2, 4
      %s47 = int_to_ptr.hbm [resolvable:$true] %s46
      %s48 = sshll.u32 [#allocation7], 4
      %s49 = int_to_ptr.vmem [resolvable:$true] %s48
      %51 = dma.hbm_to_vmem [thread:$0]  %s47, 32, %s49, [#allocation6]
    $region13: #{dqn_forward.1} parent=1 // pred_fallthru
      _
    // Predicated region
    $region14: #{dqn_forward.1} parent=1 // pred_check
      _
    $region15: #{dqn_forward.1} parent=1 // pred_check_branch
      %53 = sbr.rel (0) target = $region17
    $region16: #{dqn_forward.1} parent=1 // pred_region
      %55 = vsyncadd [#allocation9], 0
      %s56 = sshll.u32 %s3, 4
      %s57 = int_to_ptr.hbm [resolvable:$true] %s56
      %s58 = sshll.u32 [#allocation8], 4
      %s59 = int_to_ptr.vmem [resolvable:$true] %s58
      %64 = dma.hbm_to_vmem [thread:$0]  %s57, 4096, %s59, [#allocation9], 128, 128, 8
    $region17: #{dqn_forward.1} parent=1 // pred_fallthru
      _
    // Predicated region
    $region18: #{dqn_forward.1} parent=1 // pred_check
      _
    $region19: #{dqn_forward.1} parent=1 // pred_check_branch
      %66 = sbr.rel (0) target = $region21
    $region20: #{dqn_forward.1} parent=1 // pred_region
      %68 = vsyncadd [#allocation9], 0
      %s70 = sshll.u32 %s4, 4
      %s71 = int_to_ptr.hbm [resolvable:$true] %s70
      %s72 = sshll.u32 [#allocation10], 4
      %s73 = int_to_ptr.vmem [resolvable:$true] %s72
      %75 = dma.hbm_to_vmem [thread:$0]  %s71, 32, %s73, [#allocation9]
    $region21: #{dqn_forward.1} parent=1 // pred_fallthru
      _
    // Predicated region
    $region22: #{dqn_forward.1} parent=1 // pred_check
      _
    $region23: #{dqn_forward.1} parent=1 // pred_check_branch
      %77 = sbr.rel (0) target = $region25
    $region24: #{dqn_forward.1} parent=1 // pred_region
      %79 = vsyncadd [#allocation12], 0
      %s80 = sshll.u32 %s5, 4
      %s81 = int_to_ptr.hbm [resolvable:$true] %s80
      %s82 = sshll.u32 [#allocation11], 4
      %s83 = int_to_ptr.vmem [resolvable:$true] %s82
      %88 = dma.hbm_to_vmem [thread:$0]  %s81, 2048, %s83, [#allocation12], 64, 64, 4
    $region25: #{dqn_forward.1} parent=1 // pred_fallthru
      _
    // Predicated region
    $region26: #{dqn_forward.1} parent=1 // pred_check
      _
    $region27: #{dqn_forward.1} parent=1 // pred_check_branch
      %90 = sbr.rel (0) target = $region29
    $region28: #{dqn_forward.1} parent=1 // pred_region
      _
    $region29: #{dqn_forward.1} parent=1 // pred_fallthru
      _
    // Predicated region
    $region30: #{dqn_forward.1} parent=1 // pred_check
      _
    $region31: #{dqn_forward.1} parent=1 // pred_check_branch
      %92 = sbr.rel (0) target = $region33
    $region32: #{dqn_forward.1} parent=1 // pred_region
      %94 = dma.done [#allocation3], 128
    $region33: #{dqn_forward.1} parent=1 // pred_fallthru
      _
    // Predicated region
    $region34: #{dqn_forward.1} parent=1 // pred_check
      _
    $region35: #{dqn_forward.1} parent=1 // pred_check_branch
      %96 = sbr.rel (0) target = $region37
    $region36: #{dqn_forward.1} parent=1 // pred_region
      %98 = dma.done [#allocation6], 512
    $region37: #{dqn_forward.1} parent=1 // pred_fallthru
      _
    // Predicated region
    $region38: #{dqn_forward.1} parent=1 // pred_check
      _
    $region39: #{dqn_forward.1} parent=1 // pred_check_branch
      %100 = sbr.rel (0) target = $region41
    $region40: #{dqn_forward.1} parent=1 // pred_region
      %102 = dma.done [#allocation6], 32
    $region41: #{dqn_forward.1} parent=1 // pred_fallthru
      _
    // Predicated region
    $region42: #{dqn_forward.1} parent=1 // pred_check
      _
    $region43: #{dqn_forward.1} parent=1 // pred_check_branch
      %104 = sbr.rel (0) target = $region45
    $region44: #{dqn_forward.1} parent=1 // pred_region
      %106 = dma.done [#allocation9], 4096
    $region45: #{dqn_forward.1} parent=1 // pred_fallthru
      _
    // Predicated region
    $region46: #{dqn_forward.1} parent=1 // pred_check
      _
    $region47: #{dqn_forward.1} parent=1 // pred_check_branch
      %108 = sbr.rel (0) target = $region49
    $region48: #{dqn_forward.1} parent=1 // pred_region
      %110 = dma.done [#allocation9], 32
    $region49: #{dqn_forward.1} parent=1 // pred_fallthru
      _
    // Predicated region
    $region50: #{dqn_forward.1} parent=1 // pred_check
      _
    $region51: #{dqn_forward.1} parent=1 // pred_check_branch
      %112 = sbr.rel (0) target = $region53
    $region52: #{dqn_forward.1} parent=1 // pred_region
      %114 = dma.done [#allocation12], 2048
    $region53: #{dqn_forward.1} parent=1 // pred_fallthru
      _
    %v116 = vld [vmem:[#allocation2] sm:$0xff]
    %v117 = vpack.c.bf16 %v116, %v116
    %v118 = vld [vmem:[#allocation5] sm:$0xff]
    %v119 = vld [vmem:[#allocation5 + $0x8] sm:$0xff]
    %v120 = vld [vmem:[#allocation5 + $0x10] sm:$0xff]
    %v121 = vld [vmem:[#allocation5 + $0x18] sm:$0xff]
    %v122 = vld [vmem:[#allocation7] sm:$0x3]
    %v124 = vperm.slane %v122, 0
    %v125 = vperm.slane %v122, 1
    %v132 = vunpack.c.l.b16 %v118
    %v133 = vunpack.c.h.b16 %v118
    %v134 = vunpack.c.l.b16 %v119
    %v135 = vunpack.c.h.b16 %v119
    %v136 = vunpack.c.l.b16 %v120
    %v137 = vunpack.c.h.b16 %v120
    %v138 = vunpack.c.l.b16 %v121
    %v139 = vunpack.c.h.b16 %v121
    %v140 = vpack.c.b16 %v134, %v132
    %v141 = vpack.c.b16 %v135, %v133
    %v142 = vpack.c.b16 %v138, %v136
    %v143 = vpack.c.b16 %v139, %v137
    %vm148 = vcmask 261120
    %v150 = vsel %vm148, %v117, 0
    %152 = vmatpush.bf16.msra.mxu0 0
    %153 = vmatpush.bf16.msra.mxu0 0
    %154 = vmatpush.bf16.msra.mxu0 0
    %155 = vmatpush.bf16.msra.mxu0 0
    %156 = vmatpush.bf16.msra.mxu0 0
    %157 = vmatpush.bf16.msra.mxu0 0
    %158 = vmatpush.bf16.msra.mxu0 %v142
    %159 = vmatpush.bf16.msra.mxu0 %v140
    %160 = vmatmul.bf16.gmra.mxu0 %v150
    %v161 = vpop.f32.mrf.mxu0
    %v162 = vadd.f32 %v124, %v161
    %v163 = vpop.f32.mrf.mxu0
    %164 = vdwg.mxu0
    %165 = vmatpush.bf16.msra.mxu0 0
    %166 = vmatpush.bf16.msra.mxu0 0
    %167 = vmatpush.bf16.msra.mxu0 0
    %168 = vmatpush.bf16.msra.mxu0 0
    %169 = vmatpush.bf16.msra.mxu0 0
    %170 = vmatpush.bf16.msra.mxu0 0
    %171 = vmatpush.bf16.msra.mxu0 %v143
    %172 = vmatpush.bf16.msra.mxu0 %v141
    %173 = vmatmul.bf16.gmra.mxu0 %v150
    %v174 = vpop.f32.mrf.mxu0
    %v175 = vadd.f32 %v125, %v174
    %v176 = vpop.f32.mrf.mxu0
    %177 = vdwg.mxu0
    %v178 = vmax.f32 %v162, 0.0
    %v179 = vmax.f32 %v175, 0.0
    %v180 = vpack.c.bf16 %v178, %v178
    %v181 = vpack.c.bf16 %v179, %v179
    %v182 = vld [vmem:[#allocation8] sm:$0xff]
    %v183 = vld [vmem:[#allocation8 + $0x8] sm:$0xff]
    %v184 = vld [vmem:[#allocation8 + $0x10] sm:$0xff]
    %v185 = vld [vmem:[#allocation8 + $0x18] sm:$0xff]
    %v186 = vld [vmem:[#allocation8 + $0x20] sm:$0xff]
    %v187 = vld [vmem:[#allocation8 + $0x28] sm:$0xff]
    %v188 = vld [vmem:[#allocation8 + $0x30] sm:$0xff]
    %v189 = vld [vmem:[#allocation8 + $0x38] sm:$0xff]
    %v190 = vld [vmem:[#allocation8 + $0x40] sm:$0xff]
    %v191 = vld [vmem:[#allocation8 + $0x48] sm:$0xff]
    %v192 = vld [vmem:[#allocation8 + $0x50] sm:$0xff]
    %v193 = vld [vmem:[#allocation8 + $0x58] sm:$0xff]
    %v194 = vld [vmem:[#allocation8 + $0x60] sm:$0xff]
    %v195 = vld [vmem:[#allocation8 + $0x68] sm:$0xff]
    %v196 = vld [vmem:[#allocation8 + $0x70] sm:$0xff]
    %v197 = vld [vmem:[#allocation8 + $0x78] sm:$0xff]
    %v198 = vld [vmem:[#allocation8 + $0x80] sm:$0xff]
    %v199 = vld [vmem:[#allocation8 + $0x88] sm:$0xff]
    %v200 = vld [vmem:[#allocation8 + $0x90] sm:$0xff]
    %v201 = vld [vmem:[#allocation8 + $0x98] sm:$0xff]
    %v202 = vld [vmem:[#allocation8 + $0xa0] sm:$0xff]
    %v203 = vld [vmem:[#allocation8 + $0xa8] sm:$0xff]
    %v204 = vld [vmem:[#allocation8 + $0xb0] sm:$0xff]
    %v205 = vld [vmem:[#allocation8 + $0xb8] sm:$0xff]
    %v206 = vld [vmem:[#allocation8 + $0xc0] sm:$0xff]
    %v207 = vld [vmem:[#allocation8 + $0xc8] sm:$0xff]
    %v208 = vld [vmem:[#allocation8 + $0xd0] sm:$0xff]
    %v209 = vld [vmem:[#allocation8 + $0xd8] sm:$0xff]
    %v210 = vld [vmem:[#allocation8 + $0xe0] sm:$0xff]
    %v211 = vld [vmem:[#allocation8 + $0xe8] sm:$0xff]
    %v212 = vld [vmem:[#allocation8 + $0xf0] sm:$0xff]
    %v213 = vld [vmem:[#allocation8 + $0xf8] sm:$0xff]
    %v214 = vld [vmem:[#allocation10] sm:$0x3]
    %v216 = vperm.slane %v214, 0
    %v217 = vperm.slane %v214, 1
    %v252 = vunpack.c.l.b16 %v182
    %v253 = vunpack.c.h.b16 %v182
    %v254 = vunpack.c.l.b16 %v183
    %v255 = vunpack.c.h.b16 %v183
    %v256 = vunpack.c.l.b16 %v184
    %v257 = vunpack.c.h.b16 %v184
    %v258 = vunpack.c.l.b16 %v185
    %v259 = vunpack.c.h.b16 %v185
    %v260 = vunpack.c.l.b16 %v186
    %v261 = vunpack.c.h.b16 %v186
    %v262 = vunpack.c.l.b16 %v187
    %v263 = vunpack.c.h.b16 %v187
    %v264 = vunpack.c.l.b16 %v188
    %v265 = vunpack.c.h.b16 %v188
    %v266 = vunpack.c.l.b16 %v189
    %v267 = vunpack.c.h.b16 %v189
    %v268 = vunpack.c.l.b16 %v190
    %v269 = vunpack.c.h.b16 %v190
    %v270 = vunpack.c.l.b16 %v191
    %v271 = vunpack.c.h.b16 %v191
    %v272 = vunpack.c.l.b16 %v192
    %v273 = vunpack.c.h.b16 %v192
    %v274 = vunpack.c.l.b16 %v193
    %v275 = vunpack.c.h.b16 %v193
    %v276 = vunpack.c.l.b16 %v194
    %v277 = vunpack.c.h.b16 %v194
    %v278 = vunpack.c.l.b16 %v195
    %v279 = vunpack.c.h.b16 %v195
    %v280 = vunpack.c.l.b16 %v196
    %v281 = vunpack.c.h.b16 %v196
    %v282 = vunpack.c.l.b16 %v197
    %v283 = vunpack.c.h.b16 %v197
    %v284 = vunpack.c.l.b16 %v198
    %v285 = vunpack.c.h.b16 %v198
    %v286 = vunpack.c.l.b16 %v199
    %v287 = vunpack.c.h.b16 %v199
    %v288 = vunpack.c.l.b16 %v200
    %v289 = vunpack.c.h.b16 %v200
    %v290 = vunpack.c.l.b16 %v201
    %v291 = vunpack.c.h.b16 %v201
    %v292 = vunpack.c.l.b16 %v202
    %v293 = vunpack.c.h.b16 %v202
    %v294 = vunpack.c.l.b16 %v203
    %v295 = vunpack.c.h.b16 %v203
    %v296 = vunpack.c.l.b16 %v204
    %v297 = vunpack.c.h.b16 %v204
    %v298 = vunpack.c.l.b16 %v205
    %v299 = vunpack.c.h.b16 %v205
    %v300 = vunpack.c.l.b16 %v206
    %v301 = vunpack.c.h.b16 %v206
    %v302 = vunpack.c.l.b16 %v207
    %v303 = vunpack.c.h.b16 %v207
    %v304 = vunpack.c.l.b16 %v208
    %v305 = vunpack.c.h.b16 %v208
    %v306 = vunpack.c.l.b16 %v209
    %v307 = vunpack.c.h.b16 %v209
    %v308 = vunpack.c.l.b16 %v210
    %v309 = vunpack.c.h.b16 %v210
    %v310 = vunpack.c.l.b16 %v211
    %v311 = vunpack.c.h.b16 %v211
    %v312 = vunpack.c.l.b16 %v212
    %v313 = vunpack.c.h.b16 %v212
    %v314 = vunpack.c.l.b16 %v213
    %v315 = vunpack.c.h.b16 %v213
    %v316 = vpack.c.b16 %v254, %v252
    %v317 = vpack.c.b16 %v255, %v253
    %v318 = vpack.c.b16 %v258, %v256
    %v319 = vpack.c.b16 %v259, %v257
    %v320 = vpack.c.b16 %v262, %v260
    %v321 = vpack.c.b16 %v263, %v261
    %v322 = vpack.c.b16 %v266, %v264
    %v323 = vpack.c.b16 %v267, %v265
    %v324 = vpack.c.b16 %v270, %v268
    %v325 = vpack.c.b16 %v271, %v269
    %v326 = vpack.c.b16 %v274, %v272
    %v327 = vpack.c.b16 %v275, %v273
    %v328 = vpack.c.b16 %v278, %v276
    %v329 = vpack.c.b16 %v279, %v277
    %v330 = vpack.c.b16 %v282, %v280
    %v331 = vpack.c.b16 %v283, %v281
    %v332 = vpack.c.b16 %v286, %v284
    %v333 = vpack.c.b16 %v287, %v285
    %v334 = vpack.c.b16 %v290, %v288
    %v335 = vpack.c.b16 %v291, %v289
    %v336 = vpack.c.b16 %v294, %v292
    %v337 = vpack.c.b16 %v295, %v293
    %v338 = vpack.c.b16 %v298, %v296
    %v339 = vpack.c.b16 %v299, %v297
    %v340 = vpack.c.b16 %v302, %v300
    %v341 = vpack.c.b16 %v303, %v301
    %v342 = vpack.c.b16 %v306, %v304
    %v343 = vpack.c.b16 %v307, %v305
    %v344 = vpack.c.b16 %v310, %v308
    %v345 = vpack.c.b16 %v311, %v309
    %v346 = vpack.c.b16 %v314, %v312
    %v347 = vpack.c.b16 %v315, %v313
    %380 = vmatpush.bf16.msra.mxu0 %v330
    %381 = vmatpush.bf16.msra.mxu0 %v328
    %382 = vmatpush.bf16.msra.mxu0 %v326
    %383 = vmatpush.bf16.msra.mxu0 %v324
    %384 = vmatpush.bf16.msra.mxu0 %v322
    %385 = vmatpush.bf16.msra.mxu0 %v320
    %386 = vmatpush.bf16.msra.mxu0 %v318
    %387 = vmatpush.bf16.msra.mxu0 %v316
    %388 = vmatmul.bf16.gmra.mxu0 %v180
    %v389 = vpop.f32.mrf.mxu0
    %v390 = vadd.f32 %v216, %v389
    %v391 = vpop.f32.mrf.mxu0
    %392 = vdwg.mxu0
    %393 = vmatpush.bf16.msra.mxu0 %v346
    %394 = vmatpush.bf16.msra.mxu0 %v344
    %395 = vmatpush.bf16.msra.mxu0 %v342
    %396 = vmatpush.bf16.msra.mxu0 %v340
    %397 = vmatpush.bf16.msra.mxu0 %v338
    %398 = vmatpush.bf16.msra.mxu0 %v336
    %399 = vmatpush.bf16.msra.mxu0 %v334
    %400 = vmatpush.bf16.msra.mxu0 %v332
    %401 = vmatmul.bf16.gmra.mxu0 %v181
    %v402 = vpop.f32.mrf.mxu0
    %v403 = vadd.f32 %v390, %v402
    %v404 = vpop.f32.mrf.mxu0
    %405 = vdwg.mxu0
    %406 = vmatpush.bf16.msra.mxu0 %v331
    %407 = vmatpush.bf16.msra.mxu0 %v329
    %408 = vmatpush.bf16.msra.mxu0 %v327
    %409 = vmatpush.bf16.msra.mxu0 %v325
    %410 = vmatpush.bf16.msra.mxu0 %v323
    %411 = vmatpush.bf16.msra.mxu0 %v321
    %412 = vmatpush.bf16.msra.mxu0 %v319
    %413 = vmatpush.bf16.msra.mxu0 %v317
    %414 = vmatmul.bf16.gmra.mxu0 %v180
    %v415 = vpop.f32.mrf.mxu0
    %v416 = vadd.f32 %v217, %v415
    %v417 = vpop.f32.mrf.mxu0
    %418 = vdwg.mxu0
    %419 = vmatpush.bf16.msra.mxu0 %v347
    %420 = vmatpush.bf16.msra.mxu0 %v345
    %421 = vmatpush.bf16.msra.mxu0 %v343
    %422 = vmatpush.bf16.msra.mxu0 %v341
    %423 = vmatpush.bf16.msra.mxu0 %v339
    %424 = vmatpush.bf16.msra.mxu0 %v337
    %425 = vmatpush.bf16.msra.mxu0 %v335
    %426 = vmatpush.bf16.msra.mxu0 %v333
    %427 = vmatmul.bf16.gmra.mxu0 %v181
    %v428 = vpop.f32.mrf.mxu0
    %v429 = vadd.f32 %v416, %v428
    %v430 = vpop.f32.mrf.mxu0
    %431 = vdwg.mxu0
    %v432 = vmax.f32 %v403, 0.0
    %v433 = vmax.f32 %v429, 0.0
    %v434 = vpack.c.bf16 %v432, %v432
    %v435 = vpack.c.bf16 %v433, %v433
    %v436 = vld [vmem:[#allocation11] sm:$0xf]
    %v437 = vld [vmem:[#allocation11 + $0x4] sm:$0xf]
    %v438 = vld [vmem:[#allocation11 + $0x8] sm:$0xf]
    %v439 = vld [vmem:[#allocation11 + $0xc] sm:$0xf]
    %v440 = vld [vmem:[#allocation11 + $0x10] sm:$0xf]
    %v441 = vld [vmem:[#allocation11 + $0x14] sm:$0xf]
    %v442 = vld [vmem:[#allocation11 + $0x18] sm:$0xf]
    %v443 = vld [vmem:[#allocation11 + $0x1c] sm:$0xf]
    %v444 = vld [vmem:[#allocation11 + $0x20] sm:$0xf]
    %v445 = vld [vmem:[#allocation11 + $0x24] sm:$0xf]
    %v446 = vld [vmem:[#allocation11 + $0x28] sm:$0xf]
    %v447 = vld [vmem:[#allocation11 + $0x2c] sm:$0xf]
    %v448 = vld [vmem:[#allocation11 + $0x30] sm:$0xf]
    %v449 = vld [vmem:[#allocation11 + $0x34] sm:$0xf]
    %v450 = vld [vmem:[#allocation11 + $0x38] sm:$0xf]
    %v451 = vld [vmem:[#allocation11 + $0x3c] sm:$0xf]
    %v452 = vld [vmem:[#allocation11 + $0x40] sm:$0xf]
    %v453 = vld [vmem:[#allocation11 + $0x44] sm:$0xf]
    %v454 = vld [vmem:[#allocation11 + $0x48] sm:$0xf]
    %v455 = vld [vmem:[#allocation11 + $0x4c] sm:$0xf]
    %v456 = vld [vmem:[#allocation11 + $0x50] sm:$0xf]
    %v457 = vld [vmem:[#allocation11 + $0x54] sm:$0xf]
    %v458 = vld [vmem:[#allocation11 + $0x58] sm:$0xf]
    %v459 = vld [vmem:[#allocation11 + $0x5c] sm:$0xf]
    %v460 = vld [vmem:[#allocation11 + $0x60] sm:$0xf]
    %v461 = vld [vmem:[#allocation11 + $0x64] sm:$0xf]
    %v462 = vld [vmem:[#allocation11 + $0x68] sm:$0xf]
    %v463 = vld [vmem:[#allocation11 + $0x6c] sm:$0xf]
    %v464 = vld [vmem:[#allocation11 + $0x70] sm:$0xf]
    %v465 = vld [vmem:[#allocation11 + $0x74] sm:$0xf]
    %v466 = vld [vmem:[#allocation11 + $0x78] sm:$0xf]
    %v467 = vld [vmem:[#allocation11 + $0x7c] sm:$0xf]
    %v468 = vld [vmem:[%s6] sm:$0x1]
    %v470 = vperm.slane %v468, 0
    %v504 = vunpack.c.l.b16 %v436
    %v505 = vunpack.c.l.b16 %v437
    %v506 = vunpack.c.l.b16 %v438
    %v507 = vunpack.c.l.b16 %v439
    %v508 = vunpack.c.l.b16 %v440
    %v509 = vunpack.c.l.b16 %v441
    %v510 = vunpack.c.l.b16 %v442
    %v511 = vunpack.c.l.b16 %v443
    %v512 = vunpack.c.l.b16 %v444
    %v513 = vunpack.c.l.b16 %v445
    %v514 = vunpack.c.l.b16 %v446
    %v515 = vunpack.c.l.b16 %v447
    %v516 = vunpack.c.l.b16 %v448
    %v517 = vunpack.c.l.b16 %v449
    %v518 = vunpack.c.l.b16 %v450
    %v519 = vunpack.c.l.b16 %v451
    %v520 = vunpack.c.l.b16 %v452
    %v521 = vunpack.c.l.b16 %v453
    %v522 = vunpack.c.l.b16 %v454
    %v523 = vunpack.c.l.b16 %v455
    %v524 = vunpack.c.l.b16 %v456
    %v525 = vunpack.c.l.b16 %v457
    %v526 = vunpack.c.l.b16 %v458
    %v527 = vunpack.c.l.b16 %v459
    %v528 = vunpack.c.l.b16 %v460
    %v529 = vunpack.c.l.b16 %v461
    %v530 = vunpack.c.l.b16 %v462
    %v531 = vunpack.c.l.b16 %v463
    %v532 = vunpack.c.l.b16 %v464
    %v533 = vunpack.c.l.b16 %v465
    %v534 = vunpack.c.l.b16 %v466
    %v535 = vunpack.c.l.b16 %v467
    %v536 = vpack.c.b16 %v505, %v504
    %v537 = vpack.c.b16 %v507, %v506
    %v538 = vpack.c.b16 %v509, %v508
    %v539 = vpack.c.b16 %v511, %v510
    %v540 = vpack.c.b16 %v513, %v512
    %v541 = vpack.c.b16 %v515, %v514
    %v542 = vpack.c.b16 %v517, %v516
    %v543 = vpack.c.b16 %v519, %v518
    %v544 = vpack.c.b16 %v521, %v520
    %v545 = vpack.c.b16 %v523, %v522
    %v546 = vpack.c.b16 %v525, %v524
    %v547 = vpack.c.b16 %v527, %v526
    %v548 = vpack.c.b16 %v529, %v528
    %v549 = vpack.c.b16 %v531, %v530
    %v550 = vpack.c.b16 %v533, %v532
    %v551 = vpack.c.b16 %v535, %v534
    %568 = vmatpush.bf16.msra.mxu0 %v543
    %569 = vmatpush.bf16.msra.mxu0 %v542
    %570 = vmatpush.bf16.msra.mxu0 %v541
    %571 = vmatpush.bf16.msra.mxu0 %v540
    %572 = vmatpush.bf16.msra.mxu0 %v539
    %573 = vmatpush.bf16.msra.mxu0 %v538
    %574 = vmatpush.bf16.msra.mxu0 %v537
    %575 = vmatpush.bf16.msra.mxu0 %v536
    %576 = vmatmul.bf16.gmra.mxu0 %v434
    %v577 = vpop.f32.mrf.mxu0
    %v578 = vadd.f32 %v470, %v577
    %v579 = vpop.f32.mrf.mxu0
    %580 = vdwg.mxu0
    %581 = vmatpush.bf16.msra.mxu0 %v551
    %582 = vmatpush.bf16.msra.mxu0 %v550
    %583 = vmatpush.bf16.msra.mxu0 %v549
    %584 = vmatpush.bf16.msra.mxu0 %v548
    %585 = vmatpush.bf16.msra.mxu0 %v547
    %586 = vmatpush.bf16.msra.mxu0 %v546
    %587 = vmatpush.bf16.msra.mxu0 %v545
    %588 = vmatpush.bf16.msra.mxu0 %v544
    %589 = vmatmul.bf16.gmra.mxu0 %v435
    %v590 = vpop.f32.mrf.mxu0
    %v591 = vadd.f32 %v578, %v590
    %v592 = vpop.f32.mrf.mxu0
    %593 = vdwg.mxu0
    %594 = vst [vmem:[#allocation13] sm:$0xff] %v591
    // Predicated region
    $region54: #{dqn_forward.1} parent=1 // pred_check
      _
    $region55: #{dqn_forward.1} parent=1 // pred_check_branch
      %596 = sbr.rel (0) target = $region57
    $region56: #{dqn_forward.1} parent=1 // pred_region
      %598 = vsyncadd [#allocation4], 0
      %s600 = sshll.u32 [#allocation13], 4
      %s601 = int_to_ptr.vmem [resolvable:$true] %s600
      %s602 = sshll.u32 %s7, 4
      %s603 = int_to_ptr.hbm [resolvable:$true] %s602
      %605 = dma.vmem_to_hbm [thread:$0]  %s601, 128, %s603, [#allocation4]
    $region57: #{dqn_forward.1} parent=1 // pred_fallthru
      _
    // Predicated region
    $region58: #{dqn_forward.1} parent=1 // pred_check
      _
    $region59: #{dqn_forward.1} parent=1 // pred_check_branch
      %607 = sbr.rel (0) target = $region61
    $region60: #{dqn_forward.1} parent=1 // pred_region
      %609 = dma.done [#allocation4], 128
    $region61: #{dqn_forward.1} parent=1 // pred_fallthru
      _
    %610 = vsyncpa [#allocation3], 1
    %611 = vsyncpa [#allocation6], 1
    %612 = vsyncpa [#allocation9], 1
    %613 = vsyncpa [#allocation12], 1
    %614 = vsyncpa [#allocation4], 1

</llo_original>
